<compile_context>
chip_gen: v7x
topology: tpu7x:2x2x1
jax: 0.10.0
libtpu: 0.0.40
codegen_flags: <defaults>
</compile_context>

<pallas_src>
import math

import jax
import jax.numpy as jnp
from jax.experimental import pallas as pl
from jax.experimental.pallas import tpu as pltpu


_LANE_CANDIDATES = (4096, 2048, 1024, 512, 256, 128)
_TARGET_BLOCK_BYTES = 4 << 20          # ~4 MiB per block
_VMEM_LIMIT_BYTES = 32 << 20           # explicit; safe on v7x (64 MiB physical)


def _copy_kernel(x_ref, o_ref):
    # Pure identity copy: identical in/out block shapes, straight vld/vst.
    o_ref[...] = x_ref[...]


def _sublane_multiple(dtype) -> int:
    # Sub-32-bit dtypes pack along sublanes: 8 rows for 4B, 16 for 2B, 32 for 1B.
    itemsize = jnp.dtype(dtype).itemsize
    return max(8, 32 // itemsize)


def _choose_slab(total_elems: int, sub: int):
    """Pick (rows, lane) for a lane-dense 2-D slab covering `total_elems`.

    Prefers the largest lane width (multiple of 128) that keeps the row count
    a multiple of the sublane packing; falls back to any 128-multiple lane.
    Returns None if total_elems is not a multiple of 128.
    """
    fallback = None
    for lane in _LANE_CANDIDATES:
        if total_elems % lane:
            continue
        rows = total_elems // lane
        if rows % sub == 0:
            return rows, lane
        if fallback is None:
            fallback = (rows, lane)
    return fallback


def _choose_block_rows(rows: int, lane: int, itemsize: int, sub: int) -> int:
    """Pick a row-block size: multiple of `sub`, divides `rows`, ~4 MiB."""
    if rows % sub != 0:
        # Block must equal the full row extent (full-array dims are allowed
        # even when not (sub,128)-divisible).
        return rows
    max_rows_by_bytes = _TARGET_BLOCK_BYTES // (lane * itemsize)
    max_rows_by_bytes = max(sub, (max_rows_by_bytes // sub) * sub)
    block_rows = min(rows, max_rows_by_bytes)
    # Keep the grid exact (no ragged last block): shrink to a divisor of rows.
    while rows % block_rows != 0:
        block_rows -= sub
    return block_rows


def pallas_reshape(x, target_shape):
    """Equivalent of Reshape(target_shape).forward(x): x.view(batch, *target_shape)."""
    batch = x.shape[0]
    per_sample_in = math.prod(x.shape[1:])
    per_sample_out = math.prod(target_shape)
    assert per_sample_in == per_sample_out, "view size mismatch"

    out_shape = (batch,) + tuple(target_shape)
    total = batch * per_sample_in

    sub = _sublane_multiple(x.dtype)
    slab = _choose_slab(total, sub)
    if slab is None:
        # Not lane-divisible: the reshape is pure metadata — just view it.
        # TODO(synk): no Pallas copy issued in this (rare) path.
        return jnp.reshape(x, out_shape)

    rows, lane = slab
    itemsize = jnp.dtype(x.dtype).itemsize

    # Reshape in the wrapper (free at XLA level); kernel sees a lane-dense slab.
    x2d = jnp.reshape(x, (rows, lane))

    block_rows = _choose_block_rows(rows, lane, itemsize, sub)
    grid = (rows // block_rows,)

    y2d = pl.pallas_call(
        _copy_kernel,
        out_shape=jax.ShapeDtypeStruct((rows, lane), x.dtype),
        grid_spec=pltpu.PrefetchScalarGridSpec(
            num_scalar_prefetch=0,
            grid=grid,
            # Block indices: (i, 0) — the lane dim block spans the full lane
            # extent, so its block index is always 0.
            in_specs=[pl.BlockSpec((block_rows, lane), lambda i: (i, 0))],
            out_specs=pl.BlockSpec((block_rows, lane), lambda i: (i, 0)),
        ),
        compiler_params=pltpu.CompilerParams(
            dimension_semantics=("parallel",),
            vmem_limit_bytes=_VMEM_LIMIT_BYTES,
        ),
    )(x2d)

    # Final shape is again free metadata plumbing.
    return jnp.reshape(y2d, out_shape)


if __name__ == "__main__":
    key = jax.random.PRNGKey(0)
    # NCHW feature map reshaped per-sample, matching the PyTorch module.
    B, C, H, W = 2, 4, 16, 16
    target_shape = (8, 128)  # 4*16*16 == 8*128 == 1024

    x = jax.random.normal(key, (B, C, H, W), dtype=jnp.float32)

    y = pallas_reshape(x, target_shape)
    y = jax.block_until_ready(y)

    # Reference semantics: feature.view(batch, *target_shape)
    y_ref = jnp.reshape(x, (B,) + target_shape)
    assert y.shape == (B,) + target_shape
    assert y.dtype == x.dtype
    assert bool(jnp.array_equal(y, y_ref))

    print("KERNEL_OK")
</pallas_src>

<mosaic_0001>
module attributes {stable_mosaic.version = 11 : i64} {
  func.func @_copy_kernel(%arg0: i32, %arg1: memref<8x256xf32, #tpu.memory_space<vmem>>, %arg2: memref<8x256xf32, #tpu.memory_space<vmem>>) attributes {dimension_semantics = [#tpu.dimension_semantics<parallel>], iteration_bounds = array<i64: 1>, scalar_prefetch = 0 : i64, scratch_operands = 0 : i64, tpu.core_type = #tpu.core_type<tc>, window_params = [{transform_indices = @transform_0, window_bounds = array<i64: 8, 256>}, {transform_indices = @transform_1, window_bounds = array<i64: 8, 256>}]} {
    %c0 = arith.constant 0 : index
    %c0_0 = arith.constant 0 : index
    %0 = vector.load %arg1[%c0, %c0_0] : memref<8x256xf32, #tpu.memory_space<vmem>>, vector<8x256xf32>
    %c0_1 = arith.constant 0 : index
    %c0_2 = arith.constant 0 : index
    %1 = vector.load %arg2[%c0_1, %c0_2] : memref<8x256xf32, #tpu.memory_space<vmem>>, vector<8x256xf32>
    tpu.vector_store %arg2[%c0_1, %c0_2], %0 {strides = array<i32>} : memref<8x256xf32, #tpu.memory_space<vmem>>, vector<8x256xf32>,
    return
  }
  func.func @transform_0(%arg0: i32) -> (i32, i32) {
    %c0_i32 = arith.constant 0 : i32
    %c0_i32_0 = arith.constant 0 : i32
    return %arg0, %c0_i32 : i32, i32
  }
  func.func @transform_1(%arg0: i32) -> (i32, i32) {
    %c0_i32 = arith.constant 0 : i32
    %c0_i32_0 = arith.constant 0 : i32
    return %arg0, %c0_i32 : i32, i32
  }
}

</mosaic_0001>

<llo_original>
// kernel: tpu_custom_call.1
$region0: #{tpu_custom_call.1}
  #allocation0 [shape = 'u32[]', space=smem, size = 0x4, offset = 0x4, fixed_abs, tag = 'smem constant byte address 0x4 - core index']
  #allocation1 [shape = 'u32[144,128]{1,0:T(1,128)}', space=vmem, size = 0x12000, scoped, tag = 'internal scratch']
  %s0 = inlined_call_operand.hbm [shape: f32[8,256], index: 0, kind: input, shape index: {}]
  %s1 = inlined_call_operand.hbm [shape: f32[8,256], index: 1, kind: output, shape index: {}]
  %s2 = sld [smem:[#allocation0]]
  $region18: #{tpu_custom_call.1} parent=0
    _
  %s4 = ssub.s32 1, %s2
  %s5 = scalar_select 0, %s4, %s2
  $region1: #{tpu_custom_call.1} parent=0
    #allocation2 [shape = 'u8[8192]{0}', space=vmem, size = 0x2000, scoped, tag = 'input window, operand 0, single buffered']
    #allocation3 [shape = 's32[1]{0}', space=sflag, size = 0x4, scoped, tag = 'scoped memory for tpu_custom_call.1']
    #allocation4 [shape = 's32[1]{0}', space=sflag, size = 0x4, scoped, tag = 'scoped memory for tpu_custom_call.1']
    #allocation5 [shape = 'u8[8192]{0}', space=vmem, size = 0x2000, scoped, tag = 'output window, operand 0, single buffered']
    %6 = vsyncpa [#allocation3], 0
    %7 = vsyncpa [#allocation4], 0
    // Predicated region
    $region2: #{tpu_custom_call.1} parent=1 // pred_check
      _
    $region3: #{tpu_custom_call.1} parent=1 // pred_check_branch
      %9 = sbr.rel (0) target = $region5
    $region4: #{tpu_custom_call.1} parent=1 // pred_region
      %s11 = ssub.s32 256, 256
      %12 = vsyncadd [#allocation3], %s11
      %s14 = sshll.u32 [#allocation2], 4
      %s15 = int_to_ptr.vmem [resolvable:$true] %s14
      %17 = dma.hbm_to_vmem [thread:$0]  %s0, 256, %s15, [#allocation3]
    $region5: #{tpu_custom_call.1} parent=1 // pred_fallthru
      _
    // Predicated region
    $region6: #{tpu_custom_call.1} parent=1 // pred_check
      _
    $region7: #{tpu_custom_call.1} parent=1 // pred_check_branch
      %19 = sbr.rel (0) target = $region9
    $region8: #{tpu_custom_call.1} parent=1 // pred_region
      %20 = dma.done [#allocation3], 256
    $region9: #{tpu_custom_call.1} parent=1 // pred_fallthru
      _
    %v21 = vld [vmem:[#allocation2] sm:$0xff]
    %v22 = vld [vmem:[#allocation2 + $0x8] sm:$0xff]
    %23 = vst [vmem:[#allocation5] sm:$0xff] %v21
    %24 = vst [vmem:[#allocation5 + $0x8] sm:$0xff] %v22
    // Predicated region
    $region10: #{tpu_custom_call.1} parent=1 // pred_check
      _
    $region11: #{tpu_custom_call.1} parent=1 // pred_check_branch
      %26 = sbr.rel (0) target = $region13
    $region12: #{tpu_custom_call.1} parent=1 // pred_region
      %s28 = ssub.s32 256, 256
      %29 = vsyncadd [#allocation4], %s28
      %s31 = sshll.u32 [#allocation5], 4
      %s32 = int_to_ptr.vmem [resolvable:$true] %s31
      %34 = dma.vmem_to_hbm [thread:$0]  %s32, 256, %s1, [#allocation4]
    $region13: #{tpu_custom_call.1} parent=1 // pred_fallthru
      _
    // Predicated region
    $region14: #{tpu_custom_call.1} parent=1 // pred_check
      _
    $region15: #{tpu_custom_call.1} parent=1 // pred_check_branch
      %36 = sbr.rel (0) target = $region17
    $region16: #{tpu_custom_call.1} parent=1 // pred_region
      %37 = dma.done [#allocation4], 256
    $region17: #{tpu_custom_call.1} parent=1 // pred_fallthru
      _
    %38 = vsyncpa [#allocation3], 1
    %39 = vsyncpa [#allocation4], 1

</llo_original>
